<compile_context>
chip_gen: v5e
topology: v5e:2x2
jax: 0.10.0
libtpu: 0.0.40
codegen_flags: <defaults>
</compile_context>

<pallas_src>
import functools

import jax
import jax.numpy as jnp
from jax.experimental import pallas as pl
from jax.experimental.pallas import tpu as pltpu


# ----------------------------------------------------------------------------
# Fused kernel: patch matmul (MXU) + conv bias + LayerNorm(embed_dim).
# ----------------------------------------------------------------------------
def _patch_embed_kernel(x_ref, w_ref, b_ref, g_ref, bt_ref, o_ref, *, eps):
    # x_ref : (TN, K)   token tile, K = in_chans * P * P
    # w_ref : (K, E)    conv weight as matmul operand (resident in VMEM)
    # b_ref : (1, E)    conv bias
    # g_ref : (1, E)    LayerNorm gamma
    # bt_ref: (1, E)    LayerNorm beta
    # o_ref : (TN, E)   lane-dense output tile
    x = x_ref[...].astype(jnp.float32)
    acc = jnp.dot(x, w_ref[...].astype(jnp.float32),
                  preferred_element_type=jnp.float32)          # (TN, E)
    acc = acc + b_ref[...].astype(jnp.float32)

    # LayerNorm over embed_dim (lane axis).
    mean = jnp.mean(acc, axis=-1, keepdims=True)               # (TN, 1)
    xc = acc - mean
    var = jnp.mean(xc * xc, axis=-1, keepdims=True)
    inv = jax.lax.rsqrt(var + eps)                             # EUP
    y = xc * inv * g_ref[...].astype(jnp.float32) + bt_ref[...].astype(jnp.float32)
    o_ref[...] = y.astype(o_ref.dtype)


# ----------------------------------------------------------------------------
# Wrapper.
# ----------------------------------------------------------------------------
@functools.partial(jax.jit,
                   static_argnames=("patch_size", "eps", "block_n",
                                    "vmem_budget"))
def patch_embed_forward(x, params, *, patch_size, eps=1e-5, block_n=512,
                        vmem_budget=24 * 1024 * 1024):
    """x: (B, C, T, H, W) NCDHW -> (B, embed_dim, T, H//P, W//P)."""
    B, C, T, H, W = x.shape
    P = patch_size
    Hp, Wp = H // P, W // P
    E = params["proj_b"].shape[0]
    K = C * P * P
    N = B * T * Hp * Wp

    # im2col (layout only, done by XLA): crop remainder like the strided conv,
    # then view each patch as a flat (c, kh, kw)-ordered vector.
    xt = x[:, :, :, :Hp * P, :Wp * P]
    xt = xt.reshape(B, C, T, Hp, P, Wp, P)
    xt = jnp.transpose(xt, (0, 2, 3, 5, 1, 4, 6))      # (B, T, Hp, Wp, C, P, P)
    tokens = xt.reshape(N, K)

    # Conv3d weight (E, C, 1, P, P) -> (K, E) matmul operand; (c, kh, kw)
    # flattening order matches the im2col above.
    wT = jnp.transpose(params["proj_w"].reshape(E, K), (1, 0))

    # Token tile size: large for pipelining efficiency, budgeted for VMEM
    # (double-buffered in/out tiles + resident weight), safe on v7x (64 MiB).
    if N <= block_n:
        tn = N
    else:
        tn = block_n
        while tn > 8 and (2 * tn * (K + E) + K * E + 4 * E) * 4 > vmem_budget:
            tn //= 2

    grid = (pl.cdiv(N, tn),)
    kern = functools.partial(_patch_embed_kernel, eps=eps)
    out2d = pl.pallas_call(
        kern,
        out_shape=jax.ShapeDtypeStruct((N, E), x.dtype),
        grid=grid,
        in_specs=[
            pl.BlockSpec((tn, K), lambda i: (i, 0)),
            pl.BlockSpec((K, E), lambda i: (0, 0)),    # weight: resident
            pl.BlockSpec((1, E), lambda i: (0, 0)),
            pl.BlockSpec((1, E), lambda i: (0, 0)),
            pl.BlockSpec((1, E), lambda i: (0, 0)),
        ],
        out_specs=pl.BlockSpec((tn, E), lambda i: (i, 0)),
        compiler_params=pltpu.CompilerParams(
            dimension_semantics=("parallel",),
            vmem_limit_bytes=max(vmem_budget, 32 * 1024 * 1024),
        ),
    )(tokens, wT, params["proj_b"].reshape(1, E),
      params["ln_g"].reshape(1, E), params["ln_b"].reshape(1, E))

    out = out2d.reshape(B, T, Hp, Wp, E)
    # Module output layout is NCDHW: permute left to XLA (pure layout op).
    return jnp.transpose(out, (0, 4, 1, 2, 3))


# ----------------------------------------------------------------------------
# Deterministic parameters (PyTorch layouts).
# ----------------------------------------------------------------------------
def make_params(in_chans, embed_dim, patch_size, seed=0):
    keys = jax.random.split(jax.random.PRNGKey(seed), 4)
    n = lambda k, s, sc=0.1: sc * jax.random.normal(k, s, jnp.float32)
    return {
        # nn.Conv3d(in_chans, embed_dim, (1, P, P), (1, P, P)) weight / bias
        "proj_w": n(keys[0], (embed_dim, in_chans, 1, patch_size, patch_size)),
        "proj_b": n(keys[1], (embed_dim,)),
        # nn.LayerNorm(embed_dim)
        "ln_g": 1.0 + n(keys[2], (embed_dim,)),
        "ln_b": n(keys[3], (embed_dim,)),
    }


# ----------------------------------------------------------------------------
# Pure-JAX reference (independent path: einsum conv + LayerNorm).
# ----------------------------------------------------------------------------
def patch_embed_reference(x, params, patch_size, eps=1e-5):
    B, C, T, H, W = x.shape
    P = patch_size
    Hp, Wp = H // P, W // P
    xt = x[:, :, :, :Hp * P, :Wp * P].reshape(B, C, T, Hp, P, Wp, P)
    w = params["proj_w"][:, :, 0]                          # (E, C, P, P)
    y = jnp.einsum("bcthiwj,ecij->bthwe", xt, w,
                   precision=jax.lax.Precision.HIGHEST) + params["proj_b"]
    mean = y.mean(-1, keepdims=True)
    var = ((y - mean) ** 2).mean(-1, keepdims=True)
    y = (y - mean) / jnp.sqrt(var + eps) * params["ln_g"] + params["ln_b"]
    return jnp.transpose(y, (0, 4, 1, 2, 3))


if __name__ == "__main__":
    # Small shapes consistent with the module (in_chans=2, patch conv,
    # embed_dim a multiple of 128 for lane-dense stores).
    B, C, T, H, W = 2, 2, 4, 32, 32
    P, E = 8, 256

    key = jax.random.PRNGKey(0)
    x = jax.random.normal(key, (B, C, T, H, W), jnp.float32)
    params = make_params(C, E, P, seed=0)

    out = patch_embed_forward(x, params, patch_size=P)
    out = jax.block_until_ready(out)

    Hp, Wp = H // P, W // P
    assert out.shape == (B, E, T, Hp, Wp) and out.dtype == jnp.float32

    ref = jax.block_until_ready(patch_embed_reference(x, params, P))
    err = float(jnp.max(jnp.abs(out - ref)))
    assert bool(jnp.all(jnp.isfinite(out))) and err < 5e-2, f"max abs err {err}"
    print("KERNEL_OK")
</pallas_src>

<mosaic_0001>
module attributes {stable_mosaic.version = 11 : i64} {
  func.func @_patch_embed_kernel(%arg0: i32, %arg1: memref<128x128xf32, #tpu.memory_space<vmem>>, %arg2: memref<128x256xf32, #tpu.memory_space<vmem>>, %arg3: memref<1x256xf32, #tpu.memory_space<vmem>>, %arg4: memref<1x256xf32, #tpu.memory_space<vmem>>, %arg5: memref<1x256xf32, #tpu.memory_space<vmem>>, %arg6: memref<128x256xf32, #tpu.memory_space<vmem>>) attributes {dimension_semantics = [#tpu.dimension_semantics<parallel>], iteration_bounds = array<i64: 1>, scalar_prefetch = 0 : i64, scratch_operands = 0 : i64, tpu.core_type = #tpu.core_type<tc>, window_params = [{transform_indices = @transform_0, window_bounds = array<i64: 128, 128>}, {pipeline_mode = #tpu.pipeline_mode<synchronous>, transform_indices = @transform_1, window_bounds = array<i64: 128, 256>}, {pipeline_mode = #tpu.pipeline_mode<synchronous>, transform_indices = @transform_2, window_bounds = array<i64: 1, 256>}, {pipeline_mode = #tpu.pipeline_mode<synchronous>, transform_indices = @transform_3, window_bounds = array<i64: 1, 256>}, {pipeline_mode = #tpu.pipeline_mode<synchronous>, transform_indices = @transform_4, window_bounds = array<i64: 1, 256>}, {transform_indices = @transform_5, window_bounds = array<i64: 128, 256>}]} {
    %c0 = arith.constant 0 : index
    %c0_0 = arith.constant 0 : index
    %0 = vector.load %arg1[%c0, %c0_0] : memref<128x128xf32, #tpu.memory_space<vmem>>, vector<128x128xf32>
    %c0_1 = arith.constant 0 : index
    %c0_2 = arith.constant 0 : index
    %1 = vector.load %arg2[%c0_1, %c0_2] : memref<128x256xf32, #tpu.memory_space<vmem>>, vector<128x256xf32>
    %cst = arith.constant dense<0.000000e+00> : vector<128x256xf32>
    %2 = tpu.matmul %0, %1, %cst {dimension_numbers = #tpu.dot_dimension_numbers<[1], [0], [0], [1], [0, 0, 1, 1], [], []>} : vector<128x128xf32>, vector<128x256xf32>, vector<128x256xf32> -> vector<128x256xf32>
    %c0_3 = arith.constant 0 : index
    %c0_4 = arith.constant 0 : index
    %3 = vector.load %arg3[%c0_3, %c0_4] : memref<1x256xf32, #tpu.memory_space<vmem>>, vector<1x256xf32>
    %4 = vector.broadcast %3 : vector<1x256xf32> to vector<128x256xf32>
    %5 = arith.addf %2, %4 : vector<128x256xf32>
    %cst_5 = arith.constant dense<0.000000e+00> : vector<128xf32>
    %6 = vector.multi_reduction <add>, %5, %cst_5 [1] : vector<128x256xf32> to vector<128xf32>
    %7 = vector.shape_cast %6 : vector<128xf32> to vector<128x1xf32>
    %cst_6 = arith.constant 2.560000e+02 : f32
    %8 = vector.broadcast %cst_6 : f32 to vector<128x1xf32>
    %9 = arith.divf %7, %8 : vector<128x1xf32>
    %10 = vector.broadcast %9 : vector<128x1xf32> to vector<128x256xf32>
    %11 = arith.subf %5, %10 : vector<128x256xf32>
    %12 = arith.mulf %11, %11 : vector<128x256xf32>
    %cst_7 = arith.constant dense<0.000000e+00> : vector<128xf32>
    %13 = vector.multi_reduction <add>, %12, %cst_7 [1] : vector<128x256xf32> to vector<128xf32>
    %14 = vector.shape_cast %13 : vector<128xf32> to vector<128x1xf32>
    %cst_8 = arith.constant 2.560000e+02 : f32
    %15 = vector.broadcast %cst_8 : f32 to vector<128x1xf32>
    %16 = arith.divf %14, %15 : vector<128x1xf32>
    %cst_9 = arith.constant 9.99999974E-6 : f32
    %17 = vector.broadcast %cst_9 : f32 to vector<128x1xf32>
    %18 = arith.addf %16, %17 : vector<128x1xf32>
    %19 = math.rsqrt %18 : vector<128x1xf32>
    %20 = vector.broadcast %19 : vector<128x1xf32> to vector<128x256xf32>
    %21 = arith.mulf %11, %20 : vector<128x256xf32>
    %c0_10 = arith.constant 0 : index
    %c0_11 = arith.constant 0 : index
    %22 = vector.load %arg4[%c0_10, %c0_11] : memref<1x256xf32, #tpu.memory_space<vmem>>, vector<1x256xf32>
    %23 = vector.broadcast %22 : vector<1x256xf32> to vector<128x256xf32>
    %24 = arith.mulf %21, %23 : vector<128x256xf32>
    %c0_12 = arith.constant 0 : index
    %c0_13 = arith.constant 0 : index
    %25 = vector.load %arg5[%c0_12, %c0_13] : memref<1x256xf32, #tpu.memory_space<vmem>>, vector<1x256xf32>
    %26 = vector.broadcast %25 : vector<1x256xf32> to vector<128x256xf32>
    %27 = arith.addf %24, %26 : vector<128x256xf32>
    %c0_14 = arith.constant 0 : index
    %c0_15 = arith.constant 0 : index
    %28 = vector.load %arg6[%c0_14, %c0_15] : memref<128x256xf32, #tpu.memory_space<vmem>>, vector<128x256xf32>
    tpu.vector_store %arg6[%c0_14, %c0_15], %27 {strides = array<i32>} : memref<128x256xf32, #tpu.memory_space<vmem>>, vector<128x256xf32>,
    return
  }
  func.func @transform_0(%arg0: i32) -> (i32, i32) {
    %c0_i32 = arith.constant 0 : i32
    %c0_i32_0 = arith.constant 0 : i32
    return %arg0, %c0_i32 : i32, i32
  }
  func.func @transform_1(%arg0: i32) -> (i32, i32) {
    %c0_i32 = arith.constant 0 : i32
    %c0_i32_0 = arith.constant 0 : i32
    %c0_i32_1 = arith.constant 0 : i32
    return %c0_i32, %c0_i32_0 : i32, i32
  }
  func.func @transform_2(%arg0: i32) -> (i32, i32) {
    %c0_i32 = arith.constant 0 : i32
    %c0_i32_0 = arith.constant 0 : i32
    %c0_i32_1 = arith.constant 0 : i32
    return %c0_i32, %c0_i32_0 : i32, i32
  }
  func.func @transform_3(%arg0: i32) -> (i32, i32) {
    %c0_i32 = arith.constant 0 : i32
    %c0_i32_0 = arith.constant 0 : i32
    %c0_i32_1 = arith.constant 0 : i32
    return %c0_i32, %c0_i32_0 : i32, i32
  }
  func.func @transform_4(%arg0: i32) -> (i32, i32) {
    %c0_i32 = arith.constant 0 : i32
    %c0_i32_0 = arith.constant 0 : i32
    %c0_i32_1 = arith.constant 0 : i32
    return %c0_i32, %c0_i32_0 : i32, i32
  }
  func.func @transform_5(%arg0: i32) -> (i32, i32) {
    %c0_i32 = arith.constant 0 : i32
    %c0_i32_0 = arith.constant 0 : i32
    return %arg0, %c0_i32 : i32, i32
  }
}

</mosaic_0001>

<llo_original>
// kernel: patch_embed_forward.1
$region0: #{patch_embed_forward.1}
  #allocation0 [shape = 'u32[]', space=smem, size = 0x4, offset = 0x4, fixed_abs, tag = 'smem constant byte address 0x4 - core index']
  #allocation1 [shape = 'u32[72,128]{1,0:T(1,128)}', space=vmem, size = 0x9000, scoped, tag = 'internal scratch']
  %s0 = inlined_call_operand.vmem [shape: f32[128,128], index: 0, kind: input, shape index: {}]
  %s1 = inlined_call_operand.vmem [shape: f32[128,256], index: 1, kind: input, shape index: {}]
  %s2 = inlined_call_operand.vmem [shape: f32[1,256], index: 2, kind: input, shape index: {}]
  %s3 = inlined_call_operand.vmem [shape: f32[1,256], index: 3, kind: input, shape index: {}]
  %s4 = inlined_call_operand.vmem [shape: f32[1,256], index: 4, kind: input, shape index: {}]
  %s5 = inlined_call_operand.vmem [shape: f32[128,256], index: 5, kind: output, shape index: {}]
  %s6 = sld [smem:[#allocation0]]
  $region30: #{patch_embed_forward.1} parent=0
    _
  %s8 = ssub.s32 1, %s6
  %s9 = scalar_select 0, %s8, %s6
  // Predicated region
  $region2: #{patch_embed_forward.1} parent=0 // pred_check
    _
  $region3: #{patch_embed_forward.1} parent=0 // pred_check_branch
    %11 = sbr.rel (0) target = $region5
  $region4: #{patch_embed_forward.1} parent=0 // pred_region
    _
  $region5: #{patch_embed_forward.1} parent=0 // pred_fallthru
    _
  // Predicated region
  $region6: #{patch_embed_forward.1} parent=0 // pred_check
    _
  $region7: #{patch_embed_forward.1} parent=0 // pred_check_branch
    %13 = sbr.rel (0) target = $region9
  $region8: #{patch_embed_forward.1} parent=0 // pred_region
    _
  $region9: #{patch_embed_forward.1} parent=0 // pred_fallthru
    _
  // Predicated region
  $region10: #{patch_embed_forward.1} parent=0 // pred_check
    _
  $region11: #{patch_embed_forward.1} parent=0 // pred_check_branch
    %15 = sbr.rel (0) target = $region13
  $region12: #{patch_embed_forward.1} parent=0 // pred_region
    _
  $region13: #{patch_embed_forward.1} parent=0 // pred_fallthru
    _
  // Predicated region
  $region14: #{patch_embed_forward.1} parent=0 // pred_check
    _
  $region15: #{patch_embed_forward.1} parent=0 // pred_check_branch
    %17 = sbr.rel (0) target = $region17
  $region16: #{patch_embed_forward.1} parent=0 // pred_region
    _
  $region17: #{patch_embed_forward.1} parent=0 // pred_fallthru
    _
  // Predicated region
  $region18: #{patch_embed_forward.1} parent=0 // pred_check
    _
  $region19: #{patch_embed_forward.1} parent=0 // pred_check_branch
    %19 = sbr.rel (0) target = $region21
  $region20: #{patch_embed_forward.1} parent=0 // pred_region
    _
  $region21: #{patch_embed_forward.1} parent=0 // pred_fallthru
    _
  %v20 = vld [vmem:[%s0] sm:$0xff]
  %v21 = vld [vmem:[%s0 + $0x8] sm:$0xff]
  %v22 = vld [vmem:[%s0 + $0x10] sm:$0xff]
  %v23 = vld [vmem:[%s0 + $0x18] sm:$0xff]
  %v24 = vld [vmem:[%s0 + $0x20] sm:$0xff]
  %v25 = vld [vmem:[%s0 + $0x28] sm:$0xff]
  %v26 = vld [vmem:[%s0 + $0x30] sm:$0xff]
  %v27 = vld [vmem:[%s0 + $0x38] sm:$0xff]
  %v28 = vld [vmem:[%s0 + $0x40] sm:$0xff]
  %v29 = vld [vmem:[%s0 + $0x48] sm:$0xff]
  %v30 = vld [vmem:[%s0 + $0x50] sm:$0xff]
  %v31 = vld [vmem:[%s0 + $0x58] sm:$0xff]
  %v32 = vld [vmem:[%s0 + $0x60] sm:$0xff]
  %v33 = vld [vmem:[%s0 + $0x68] sm:$0xff]
  %v34 = vld [vmem:[%s0 + $0x70] sm:$0xff]
  %v35 = vld [vmem:[%s0 + $0x78] sm:$0xff]
  %v36 = vld [vmem:[%s1] sm:$0xff]
  %v37 = vld [vmem:[%s1 + $0x8] sm:$0xff]
  %v38 = vld [vmem:[%s1 + $0x10] sm:$0xff]
  %v39 = vld [vmem:[%s1 + $0x18] sm:$0xff]
  %v40 = vld [vmem:[%s1 + $0x20] sm:$0xff]
  %v41 = vld [vmem:[%s1 + $0x28] sm:$0xff]
  %v42 = vld [vmem:[%s1 + $0x30] sm:$0xff]
  %v43 = vld [vmem:[%s1 + $0x38] sm:$0xff]
  %v44 = vld [vmem:[%s1 + $0x40] sm:$0xff]
  %v45 = vld [vmem:[%s1 + $0x48] sm:$0xff]
  %v46 = vld [vmem:[%s1 + $0x50] sm:$0xff]
  %v47 = vld [vmem:[%s1 + $0x58] sm:$0xff]
  %v48 = vld [vmem:[%s1 + $0x60] sm:$0xff]
  %v49 = vld [vmem:[%s1 + $0x68] sm:$0xff]
  %v50 = vld [vmem:[%s1 + $0x70] sm:$0xff]
  %v51 = vld [vmem:[%s1 + $0x78] sm:$0xff]
  %v52 = vld [vmem:[%s1 + $0x80] sm:$0xff]
  %v53 = vld [vmem:[%s1 + $0x88] sm:$0xff]
  %v54 = vld [vmem:[%s1 + $0x90] sm:$0xff]
  %v55 = vld [vmem:[%s1 + $0x98] sm:$0xff]
  %v56 = vld [vmem:[%s1 + $0xa0] sm:$0xff]
  %v57 = vld [vmem:[%s1 + $0xa8] sm:$0xff]
  %v58 = vld [vmem:[%s1 + $0xb0] sm:$0xff]
  %v59 = vld [vmem:[%s1 + $0xb8] sm:$0xff]
  %v60 = vld [vmem:[%s1 + $0xc0] sm:$0xff]
  %v61 = vld [vmem:[%s1 + $0xc8] sm:$0xff]
  %v62 = vld [vmem:[%s1 + $0xd0] sm:$0xff]
  %v63 = vld [vmem:[%s1 + $0xd8] sm:$0xff]
  %v64 = vld [vmem:[%s1 + $0xe0] sm:$0xff]
  %v65 = vld [vmem:[%s1 + $0xe8] sm:$0xff]
  %v66 = vld [vmem:[%s1 + $0xf0] sm:$0xff]
  %v67 = vld [vmem:[%s1 + $0xf8] sm:$0xff]
  %v68 = vld [vmem:[%s2] sm:$0x3]
  %v70 = vperm.slane %v68, 0
  %v71 = vperm.slane %v68, 1
  %74 = vmatpush.msra.mxu0 %v66
  %75 = vmatpush.msra.mxu0 %v64
  %76 = vmatpush.msra.mxu0 %v62
  %77 = vmatpush.msra.mxu0 %v60
  %78 = vmatpush.msra.mxu0 %v58
  %79 = vmatpush.msra.mxu0 %v56
  %80 = vmatpush.msra.mxu0 %v54
  %81 = vmatpush.msra.mxu0 %v52
  %82 = vmatpush.msra.mxu0 %v50
  %83 = vmatpush.msra.mxu0 %v48
  %84 = vmatpush.msra.mxu0 %v46
  %85 = vmatpush.msra.mxu0 %v44
  %86 = vmatpush.msra.mxu0 %v42
  %87 = vmatpush.msra.mxu0 %v40
  %88 = vmatpush.msra.mxu0 %v38
  %89 = vmatpush.msra.mxu0 %v36
  %90 = vmatmul.f32.gmra.mxu0 %v20
  %v91 = vpop.f32.mrf.mxu0
  %v92 = vadd.f32 %v70, %v91
  %93 = vmatmul.f32.gmra.mxu0 %v21
  %v94 = vpop.f32.mrf.mxu0
  %v95 = vadd.f32 %v70, %v94
  %96 = vmatmul.f32.gmra.mxu0 %v22
  %v97 = vpop.f32.mrf.mxu0
  %v98 = vadd.f32 %v70, %v97
  %99 = vmatmul.f32.gmra.mxu0 %v23
  %v100 = vpop.f32.mrf.mxu0
  %v101 = vadd.f32 %v70, %v100
  %102 = vmatmul.f32.gmra.mxu0 %v24
  %v103 = vpop.f32.mrf.mxu0
  %v104 = vadd.f32 %v70, %v103
  %105 = vmatmul.f32.gmra.mxu0 %v25
  %v106 = vpop.f32.mrf.mxu0
  %v107 = vadd.f32 %v70, %v106
  %108 = vmatmul.f32.gmra.mxu0 %v26
  %v109 = vpop.f32.mrf.mxu0
  %v110 = vadd.f32 %v70, %v109
  %111 = vmatmul.f32.gmra.mxu0 %v27
  %v112 = vpop.f32.mrf.mxu0
  %v113 = vadd.f32 %v70, %v112
  %114 = vmatmul.f32.gmra.mxu0 %v28
  %v115 = vpop.f32.mrf.mxu0
  %v116 = vadd.f32 %v70, %v115
  %117 = vmatmul.f32.gmra.mxu0 %v29
  %v118 = vpop.f32.mrf.mxu0
  %v119 = vadd.f32 %v70, %v118
  %120 = vmatmul.f32.gmra.mxu0 %v30
  %v121 = vpop.f32.mrf.mxu0
  %v122 = vadd.f32 %v70, %v121
  %123 = vmatmul.f32.gmra.mxu0 %v31
  %v124 = vpop.f32.mrf.mxu0
  %v125 = vadd.f32 %v70, %v124
  %126 = vmatmul.f32.gmra.mxu0 %v32
  %v127 = vpop.f32.mrf.mxu0
  %v128 = vadd.f32 %v70, %v127
  %129 = vmatmul.f32.gmra.mxu0 %v33
  %v130 = vpop.f32.mrf.mxu0
  %v131 = vadd.f32 %v70, %v130
  %132 = vmatmul.f32.gmra.mxu0 %v34
  %v133 = vpop.f32.mrf.mxu0
  %v134 = vadd.f32 %v70, %v133
  %135 = vmatmul.f32.gmra.mxu0 %v35
  %v136 = vpop.f32.mrf.mxu0
  %v137 = vadd.f32 %v70, %v136
  %138 = vdwg.mxu0
  %139 = vmatpush.msra.mxu0 %v67
  %140 = vmatpush.msra.mxu0 %v65
  %141 = vmatpush.msra.mxu0 %v63
  %142 = vmatpush.msra.mxu0 %v61
  %143 = vmatpush.msra.mxu0 %v59
  %144 = vmatpush.msra.mxu0 %v57
  %145 = vmatpush.msra.mxu0 %v55
  %146 = vmatpush.msra.mxu0 %v53
  %147 = vmatpush.msra.mxu0 %v51
  %148 = vmatpush.msra.mxu0 %v49
  %149 = vmatpush.msra.mxu0 %v47
  %150 = vmatpush.msra.mxu0 %v45
  %151 = vmatpush.msra.mxu0 %v43
  %152 = vmatpush.msra.mxu0 %v41
  %153 = vmatpush.msra.mxu0 %v39
  %154 = vmatpush.msra.mxu0 %v37
  %155 = vmatmul.f32.gmra.mxu0 %v20
  %v156 = vpop.f32.mrf.mxu0
  %v157 = vadd.f32 %v71, %v156
  %158 = vmatmul.f32.gmra.mxu0 %v21
  %v159 = vpop.f32.mrf.mxu0
  %v160 = vadd.f32 %v71, %v159
  %161 = vmatmul.f32.gmra.mxu0 %v22
  %v162 = vpop.f32.mrf.mxu0
  %v163 = vadd.f32 %v71, %v162
  %164 = vmatmul.f32.gmra.mxu0 %v23
  %v165 = vpop.f32.mrf.mxu0
  %v166 = vadd.f32 %v71, %v165
  %167 = vmatmul.f32.gmra.mxu0 %v24
  %v168 = vpop.f32.mrf.mxu0
  %v169 = vadd.f32 %v71, %v168
  %170 = vmatmul.f32.gmra.mxu0 %v25
  %v171 = vpop.f32.mrf.mxu0
  %v172 = vadd.f32 %v71, %v171
  %173 = vmatmul.f32.gmra.mxu0 %v26
  %v174 = vpop.f32.mrf.mxu0
  %v175 = vadd.f32 %v71, %v174
  %176 = vmatmul.f32.gmra.mxu0 %v27
  %v177 = vpop.f32.mrf.mxu0
  %v178 = vadd.f32 %v71, %v177
  %179 = vmatmul.f32.gmra.mxu0 %v28
  %v180 = vpop.f32.mrf.mxu0
  %v181 = vadd.f32 %v71, %v180
  %182 = vmatmul.f32.gmra.mxu0 %v29
  %v183 = vpop.f32.mrf.mxu0
  %v184 = vadd.f32 %v71, %v183
  %185 = vmatmul.f32.gmra.mxu0 %v30
  %v186 = vpop.f32.mrf.mxu0
  %v187 = vadd.f32 %v71, %v186
  %188 = vmatmul.f32.gmra.mxu0 %v31
  %v189 = vpop.f32.mrf.mxu0
  %v190 = vadd.f32 %v71, %v189
  %191 = vmatmul.f32.gmra.mxu0 %v32
  %v192 = vpop.f32.mrf.mxu0
  %v193 = vadd.f32 %v71, %v192
  %194 = vmatmul.f32.gmra.mxu0 %v33
  %v195 = vpop.f32.mrf.mxu0
  %v196 = vadd.f32 %v71, %v195
  %197 = vmatmul.f32.gmra.mxu0 %v34
  %v198 = vpop.f32.mrf.mxu0
  %v199 = vadd.f32 %v71, %v198
  %200 = vmatmul.f32.gmra.mxu0 %v35
  %v201 = vpop.f32.mrf.mxu0
  %v202 = vadd.f32 %v71, %v201
  %203 = vdwg.mxu0
  %v204 = vadd.f32 %v92, %v157
  %205 = vadd.xlane.f32.xlu0 %v204
  %v206 = vpop.xlane.xlu0 %205
  %v207 = vadd.f32 %v95, %v160
  %208 = vadd.xlane.f32.xlu0 %v207
  %v209 = vpop.xlane.xlu0 %208
  %v210 = vadd.f32 %v98, %v163
  %211 = vadd.xlane.f32.xlu0 %v210
  %v212 = vpop.xlane.xlu0 %211
  %v213 = vadd.f32 %v101, %v166
  %214 = vadd.xlane.f32.xlu0 %v213
  %v215 = vpop.xlane.xlu0 %214
  %v216 = vadd.f32 %v104, %v169
  %217 = vadd.xlane.f32.xlu0 %v216
  %v218 = vpop.xlane.xlu0 %217
  %v219 = vadd.f32 %v107, %v172
  %220 = vadd.xlane.f32.xlu0 %v219
  %v221 = vpop.xlane.xlu0 %220
  %v222 = vadd.f32 %v110, %v175
  %223 = vadd.xlane.f32.xlu0 %v222
  %v224 = vpop.xlane.xlu0 %223
  %v225 = vadd.f32 %v113, %v178
  %226 = vadd.xlane.f32.xlu0 %v225
  %v227 = vpop.xlane.xlu0 %226
  %v228 = vadd.f32 %v116, %v181
  %229 = vadd.xlane.f32.xlu0 %v228
  %v230 = vpop.xlane.xlu0 %229
  %v231 = vadd.f32 %v119, %v184
  %232 = vadd.xlane.f32.xlu0 %v231
  %v233 = vpop.xlane.xlu0 %232
  %v234 = vadd.f32 %v122, %v187
  %235 = vadd.xlane.f32.xlu0 %v234
  %v236 = vpop.xlane.xlu0 %235
  %v237 = vadd.f32 %v125, %v190
  %238 = vadd.xlane.f32.xlu0 %v237
  %v239 = vpop.xlane.xlu0 %238
  %v240 = vadd.f32 %v128, %v193
  %241 = vadd.xlane.f32.xlu0 %v240
  %v242 = vpop.xlane.xlu0 %241
  %v243 = vadd.f32 %v131, %v196
  %244 = vadd.xlane.f32.xlu0 %v243
  %v245 = vpop.xlane.xlu0 %244
  %v246 = vadd.f32 %v134, %v199
  %247 = vadd.xlane.f32.xlu0 %v246
  %v248 = vpop.xlane.xlu0 %247
  %v249 = vadd.f32 %v137, %v202
  %250 = vadd.xlane.f32.xlu0 %v249
  %v251 = vpop.xlane.xlu0 %250
  %v252 = vrcp.pop 256.0
  %v253 = vmul.f32 256.0, %v252
  %v254 = vsub.f32 1.0, %v253
  %v255 = vmul.f32 %v252, %v254
  %v256 = vadd.f32 %v252, %v255
  %vm257 = vweird.f32 %v252
  %v258 = vsel %vm257, %v252, %v256
  %v259 = vmul.f32 %v206, %v258
  %v260 = vmul.f32 %v209, %v258
  %v261 = vmul.f32 %v212, %v258
  %v262 = vmul.f32 %v215, %v258
  %v263 = vmul.f32 %v218, %v258
  %v264 = vmul.f32 %v221, %v258
  %v265 = vmul.f32 %v224, %v258
  %v266 = vmul.f32 %v227, %v258
  %v267 = vmul.f32 %v230, %v258
  %v268 = vmul.f32 %v233, %v258
  %v269 = vmul.f32 %v236, %v258
  %v270 = vmul.f32 %v239, %v258
  %v271 = vmul.f32 %v242, %v258
  %v272 = vmul.f32 %v245, %v258
  %v273 = vmul.f32 %v248, %v258
  %v274 = vmul.f32 %v251, %v258
  %v275 = vsub.f32 %v92, %v259
  %v276 = vsub.f32 %v157, %v259
  %v277 = vsub.f32 %v95, %v260
  %v278 = vsub.f32 %v160, %v260
  %v279 = vsub.f32 %v98, %v261
  %v280 = vsub.f32 %v163, %v261
  %v281 = vsub.f32 %v101, %v262
  %v282 = vsub.f32 %v166, %v262
  %v283 = vsub.f32 %v104, %v263
  %v284 = vsub.f32 %v169, %v263
  %v285 = vsub.f32 %v107, %v264
  %v286 = vsub.f32 %v172, %v264
  %v287 = vsub.f32 %v110, %v265
  %v288 = vsub.f32 %v175, %v265
  %v289 = vsub.f32 %v113, %v266
  %v290 = vsub.f32 %v178, %v266
  %v291 = vsub.f32 %v116, %v267
  %v292 = vsub.f32 %v181, %v267
  %v293 = vsub.f32 %v119, %v268
  %v294 = vsub.f32 %v184, %v268
  %v295 = vsub.f32 %v122, %v269
  %v296 = vsub.f32 %v187, %v269
  %v297 = vsub.f32 %v125, %v270
  %v298 = vsub.f32 %v190, %v270
  %v299 = vsub.f32 %v128, %v271
  %v300 = vsub.f32 %v193, %v271
  %v301 = vsub.f32 %v131, %v272
  %v302 = vsub.f32 %v196, %v272
  %v303 = vsub.f32 %v134, %v273
  %v304 = vsub.f32 %v199, %v273
  %v305 = vsub.f32 %v137, %v274
  %v306 = vsub.f32 %v202, %v274
  %v307 = vmul.f32 %v275, %v275
  %v308 = vmul.f32 %v276, %v276
  %v309 = vmul.f32 %v277, %v277
  %v310 = vmul.f32 %v278, %v278
  %v311 = vmul.f32 %v279, %v279
  %v312 = vmul.f32 %v280, %v280
  %v313 = vmul.f32 %v281, %v281
  %v314 = vmul.f32 %v282, %v282
  %v315 = vmul.f32 %v283, %v283
  %v316 = vmul.f32 %v284, %v284
  %v317 = vmul.f32 %v285, %v285
  %v318 = vmul.f32 %v286, %v286
  %v319 = vmul.f32 %v287, %v287
  %v320 = vmul.f32 %v288, %v288
  %v321 = vmul.f32 %v289, %v289
  %v322 = vmul.f32 %v290, %v290
  %v323 = vmul.f32 %v291, %v291
  %v324 = vmul.f32 %v292, %v292
  %v325 = vmul.f32 %v293, %v293
  %v326 = vmul.f32 %v294, %v294
  %v327 = vmul.f32 %v295, %v295
  %v328 = vmul.f32 %v296, %v296
  %v329 = vmul.f32 %v297, %v297
  %v330 = vmul.f32 %v298, %v298
  %v331 = vmul.f32 %v299, %v299
  %v332 = vmul.f32 %v300, %v300
  %v333 = vmul.f32 %v301, %v301
  %v334 = vmul.f32 %v302, %v302
  %v335 = vmul.f32 %v303, %v303
  %v336 = vmul.f32 %v304, %v304
  %v337 = vmul.f32 %v305, %v305
  %v338 = vmul.f32 %v306, %v306
  %v339 = vadd.f32 %v307, %v308
  %340 = vadd.xlane.f32.xlu0 %v339
  %v341 = vpop.xlane.xlu0 %340
  %v342 = vadd.f32 %v309, %v310
  %343 = vadd.xlane.f32.xlu0 %v342
  %v344 = vpop.xlane.xlu0 %343
  %v345 = vadd.f32 %v311, %v312
  %346 = vadd.xlane.f32.xlu0 %v345
  %v347 = vpop.xlane.xlu0 %346
  %v348 = vadd.f32 %v313, %v314
  %349 = vadd.xlane.f32.xlu0 %v348
  %v350 = vpop.xlane.xlu0 %349
  %v351 = vadd.f32 %v315, %v316
  %352 = vadd.xlane.f32.xlu0 %v351
  %v353 = vpop.xlane.xlu0 %352
  %v354 = vadd.f32 %v317, %v318
  %355 = vadd.xlane.f32.xlu0 %v354
  %v356 = vpop.xlane.xlu0 %355
  %v357 = vadd.f32 %v319, %v320
  %358 = vadd.xlane.f32.xlu0 %v357
  %v359 = vpop.xlane.xlu0 %358
  %v360 = vadd.f32 %v321, %v322
  %361 = vadd.xlane.f32.xlu0 %v360
  %v362 = vpop.xlane.xlu0 %361
  %v363 = vadd.f32 %v323, %v324
  %364 = vadd.xlane.f32.xlu0 %v363
  %v365 = vpop.xlane.xlu0 %364
  %v366 = vadd.f32 %v325, %v326
  %367 = vadd.xlane.f32.xlu0 %v366
  %v368 = vpop.xlane.xlu0 %367
  %v369 = vadd.f32 %v327, %v328
  %370 = vadd.xlane.f32.xlu0 %v369
  %v371 = vpop.xlane.xlu0 %370
  %v372 = vadd.f32 %v329, %v330
  %373 = vadd.xlane.f32.xlu0 %v372
  %v374 = vpop.xlane.xlu0 %373
  %v375 = vadd.f32 %v331, %v332
  %376 = vadd.xlane.f32.xlu0 %v375
  %v377 = vpop.xlane.xlu0 %376
  %v378 = vadd.f32 %v333, %v334
  %379 = vadd.xlane.f32.xlu0 %v378
  %v380 = vpop.xlane.xlu0 %379
  %v381 = vadd.f32 %v335, %v336
  %382 = vadd.xlane.f32.xlu0 %v381
  %v383 = vpop.xlane.xlu0 %382
  %v384 = vadd.f32 %v337, %v338
  %385 = vadd.xlane.f32.xlu0 %v384
  %v386 = vpop.xlane.xlu0 %385
  %v387 = vmul.f32 %v341, %v258
  %v388 = vmul.f32 %v344, %v258
  %v389 = vmul.f32 %v347, %v258
  %v390 = vmul.f32 %v350, %v258
  %v391 = vmul.f32 %v353, %v258
  %v392 = vmul.f32 %v356, %v258
  %v393 = vmul.f32 %v359, %v258
  %v394 = vmul.f32 %v362, %v258
  %v395 = vmul.f32 %v365, %v258
  %v396 = vmul.f32 %v368, %v258
  %v397 = vmul.f32 %v371, %v258
  %v398 = vmul.f32 %v374, %v258
  %v399 = vmul.f32 %v377, %v258
  %v400 = vmul.f32 %v380, %v258
  %v401 = vmul.f32 %v383, %v258
  %v402 = vmul.f32 %v386, %v258
  %v403 = vadd.f32 %v387, 1e-05
  %v404 = vadd.f32 %v388, 1e-05
  %v405 = vadd.f32 %v389, 1e-05
  %v406 = vadd.f32 %v390, 1e-05
  %v407 = vadd.f32 %v391, 1e-05
  %v408 = vadd.f32 %v392, 1e-05
  %v409 = vadd.f32 %v393, 1e-05
  %v410 = vadd.f32 %v394, 1e-05
  %v411 = vadd.f32 %v395, 1e-05
  %v412 = vadd.f32 %v396, 1e-05
  %v413 = vadd.f32 %v397, 1e-05
  %v414 = vadd.f32 %v398, 1e-05
  %v415 = vadd.f32 %v399, 1e-05
  %v416 = vadd.f32 %v400, 1e-05
  %v417 = vadd.f32 %v401, 1e-05
  %v418 = vadd.f32 %v402, 1e-05
  %v419 = vrsqrt.pop %v403
  %v420 = vmul.f32 %v419, %v403
  %v421 = vmul.f32 %v420, %v419
  %v422 = vmul.f32 0.5, %v421
  %v423 = vsub.f32 1.5, %v422
  %v424 = vmul.f32 %v419, %v423
  %vm425 = vweird.f32 %v403
  %vm426 = vweird.f32 %v419
  %vm427 = vmor %vm425, %vm426
  %v428 = vsel %vm427, %v419, %v424
  %v429 = vrsqrt.pop %v404
  %v430 = vmul.f32 %v429, %v404
  %v431 = vmul.f32 %v430, %v429
  %v432 = vmul.f32 0.5, %v431
  %v433 = vsub.f32 1.5, %v432
  %v434 = vmul.f32 %v429, %v433
  %vm435 = vweird.f32 %v404
  %vm436 = vweird.f32 %v429
  %vm437 = vmor %vm435, %vm436
  %v438 = vsel %vm437, %v429, %v434
  %v439 = vrsqrt.pop %v405
  %v440 = vmul.f32 %v439, %v405
  %v441 = vmul.f32 %v440, %v439
  %v442 = vmul.f32 0.5, %v441
  %v443 = vsub.f32 1.5, %v442
  %v444 = vmul.f32 %v439, %v443
  %vm445 = vweird.f32 %v405
  %vm446 = vweird.f32 %v439
  %vm447 = vmor %vm445, %vm446
  %v448 = vsel %vm447, %v439, %v444
  %v449 = vrsqrt.pop %v406
  %v450 = vmul.f32 %v449, %v406
  %v451 = vmul.f32 %v450, %v449
  %v452 = vmul.f32 0.5, %v451
  %v453 = vsub.f32 1.5, %v452
  %v454 = vmul.f32 %v449, %v453
  %vm455 = vweird.f32 %v406
  %vm456 = vweird.f32 %v449
  %vm457 = vmor %vm455, %vm456
  %v458 = vsel %vm457, %v449, %v454
  %v459 = vrsqrt.pop %v407
  %v460 = vmul.f32 %v459, %v407
  %v461 = vmul.f32 %v460, %v459
  %v462 = vmul.f32 0.5, %v461
  %v463 = vsub.f32 1.5, %v462
  %v464 = vmul.f32 %v459, %v463
  %vm465 = vweird.f32 %v407
  %vm466 = vweird.f32 %v459
  %vm467 = vmor %vm465, %vm466
  %v468 = vsel %vm467, %v459, %v464
  %v469 = vrsqrt.pop %v408
  %v470 = vmul.f32 %v469, %v408
  %v471 = vmul.f32 %v470, %v469
  %v472 = vmul.f32 0.5, %v471
  %v473 = vsub.f32 1.5, %v472
  %v474 = vmul.f32 %v469, %v473
  %vm475 = vweird.f32 %v408
  %vm476 = vweird.f32 %v469
  %vm477 = vmor %vm475, %vm476
  %v478 = vsel %vm477, %v469, %v474
  %v479 = vrsqrt.pop %v409
  %v480 = vmul.f32 %v479, %v409
  %v481 = vmul.f32 %v480, %v479
  %v482 = vmul.f32 0.5, %v481
  %v483 = vsub.f32 1.5, %v482
  %v484 = vmul.f32 %v479, %v483
  %vm485 = vweird.f32 %v409
  %vm486 = vweird.f32 %v479
  %vm487 = vmor %vm485, %vm486
  %v488 = vsel %vm487, %v479, %v484
  %v489 = vrsqrt.pop %v410
  %v490 = vmul.f32 %v489, %v410
  %v491 = vmul.f32 %v490, %v489
  %v492 = vmul.f32 0.5, %v491
  %v493 = vsub.f32 1.5, %v492
  %v494 = vmul.f32 %v489, %v493
  %vm495 = vweird.f32 %v410
  %vm496 = vweird.f32 %v489
  %vm497 = vmor %vm495, %vm496
  %v498 = vsel %vm497, %v489, %v494
  %v499 = vrsqrt.pop %v411
  %v500 = vmul.f32 %v499, %v411
  %v501 = vmul.f32 %v500, %v499
  %v502 = vmul.f32 0.5, %v501
  %v503 = vsub.f32 1.5, %v502
  %v504 = vmul.f32 %v499, %v503
  %vm505 = vweird.f32 %v411
  %vm506 = vweird.f32 %v499
  %vm507 = vmor %vm505, %vm506
  %v508 = vsel %vm507, %v499, %v504
  %v509 = vrsqrt.pop %v412
  %v510 = vmul.f32 %v509, %v412
  %v511 = vmul.f32 %v510, %v509
  %v512 = vmul.f32 0.5, %v511
  %v513 = vsub.f32 1.5, %v512
  %v514 = vmul.f32 %v509, %v513
  %vm515 = vweird.f32 %v412
  %vm516 = vweird.f32 %v509
  %vm517 = vmor %vm515, %vm516
  %v518 = vsel %vm517, %v509, %v514
  %v519 = vrsqrt.pop %v413
  %v520 = vmul.f32 %v519, %v413
  %v521 = vmul.f32 %v520, %v519
  %v522 = vmul.f32 0.5, %v521
  %v523 = vsub.f32 1.5, %v522
  %v524 = vmul.f32 %v519, %v523
  %vm525 = vweird.f32 %v413
  %vm526 = vweird.f32 %v519
  %vm527 = vmor %vm525, %vm526
  %v528 = vsel %vm527, %v519, %v524
  %v529 = vrsqrt.pop %v414
  %v530 = vmul.f32 %v529, %v414
  %v531 = vmul.f32 %v530, %v529
  %v532 = vmul.f32 0.5, %v531
  %v533 = vsub.f32 1.5, %v532
  %v534 = vmul.f32 %v529, %v533
  %vm535 = vweird.f32 %v414
  %vm536 = vweird.f32 %v529
  %vm537 = vmor %vm535, %vm536
  %v538 = vsel %vm537, %v529, %v534
  %v539 = vrsqrt.pop %v415
  %v540 = vmul.f32 %v539, %v415
  %v541 = vmul.f32 %v540, %v539
  %v542 = vmul.f32 0.5, %v541
  %v543 = vsub.f32 1.5, %v542
  %v544 = vmul.f32 %v539, %v543
  %vm545 = vweird.f32 %v415
  %vm546 = vweird.f32 %v539
  %vm547 = vmor %vm545, %vm546
  %v548 = vsel %vm547, %v539, %v544
  %v549 = vrsqrt.pop %v416
  %v550 = vmul.f32 %v549, %v416
  %v551 = vmul.f32 %v550, %v549
  %v552 = vmul.f32 0.5, %v551
  %v553 = vsub.f32 1.5, %v552
  %v554 = vmul.f32 %v549, %v553
  %vm555 = vweird.f32 %v416
  %vm556 = vweird.f32 %v549
  %vm557 = vmor %vm555, %vm556
  %v558 = vsel %vm557, %v549, %v554
  %v559 = vrsqrt.pop %v417
  %v560 = vmul.f32 %v559, %v417
  %v561 = vmul.f32 %v560, %v559
  %v562 = vmul.f32 0.5, %v561
  %v563 = vsub.f32 1.5, %v562
  %v564 = vmul.f32 %v559, %v563
  %vm565 = vweird.f32 %v417
  %vm566 = vweird.f32 %v559
  %vm567 = vmor %vm565, %vm566
  %v568 = vsel %vm567, %v559, %v564
  %v569 = vrsqrt.pop %v418
  %v570 = vmul.f32 %v569, %v418
  %v571 = vmul.f32 %v570, %v569
  %v572 = vmul.f32 0.5, %v571
  %v573 = vsub.f32 1.5, %v572
  %v574 = vmul.f32 %v569, %v573
  %vm575 = vweird.f32 %v418
  %vm576 = vweird.f32 %v569
  %vm577 = vmor %vm575, %vm576
  %v578 = vsel %vm577, %v569, %v574
  %v579 = vmul.f32 %v275, %v428
  %v580 = vmul.f32 %v276, %v428
  %v581 = vmul.f32 %v277, %v438
  %v582 = vmul.f32 %v278, %v438
  %v583 = vmul.f32 %v279, %v448
  %v584 = vmul.f32 %v280, %v448
  %v585 = vmul.f32 %v281, %v458
  %v586 = vmul.f32 %v282, %v458
  %v587 = vmul.f32 %v283, %v468
  %v588 = vmul.f32 %v284, %v468
  %v589 = vmul.f32 %v285, %v478
  %v590 = vmul.f32 %v286, %v478
  %v591 = vmul.f32 %v287, %v488
  %v592 = vmul.f32 %v288, %v488
  %v593 = vmul.f32 %v289, %v498
  %v594 = vmul.f32 %v290, %v498
  %v595 = vmul.f32 %v291, %v508
  %v596 = vmul.f32 %v292, %v508
  %v597 = vmul.f32 %v293, %v518
  %v598 = vmul.f32 %v294, %v518
  %v599 = vmul.f32 %v295, %v528
  %v600 = vmul.f32 %v296, %v528
  %v601 = vmul.f32 %v297, %v538
  %v602 = vmul.f32 %v298, %v538
  %v603 = vmul.f32 %v299, %v548
  %v604 = vmul.f32 %v300, %v548
  %v605 = vmul.f32 %v301, %v558
  %v606 = vmul.f32 %v302, %v558
  %v607 = vmul.f32 %v303, %v568
  %v608 = vmul.f32 %v304, %v568
  %v609 = vmul.f32 %v305, %v578
  %v610 = vmul.f32 %v306, %v578
  %v611 = vld [vmem:[%s3] sm:$0x3]
  %v613 = vperm.slane %v611, 0
  %v614 = vperm.slane %v611, 1
  %v617 = vmul.f32 %v579, %v613
  %v618 = vmul.f32 %v580, %v614
  %v619 = vmul.f32 %v581, %v613
  %v620 = vmul.f32 %v582, %v614
  %v621 = vmul.f32 %v583, %v613
  %v622 = vmul.f32 %v584, %v614
  %v623 = vmul.f32 %v585, %v613
  %v624 = vmul.f32 %v586, %v614
  %v625 = vmul.f32 %v587, %v613
  %v626 = vmul.f32 %v588, %v614
  %v627 = vmul.f32 %v589, %v613
  %v628 = vmul.f32 %v590, %v614
  %v629 = vmul.f32 %v591, %v613
  %v630 = vmul.f32 %v592, %v614
  %v631 = vmul.f32 %v593, %v613
  %v632 = vmul.f32 %v594, %v614
  %v633 = vmul.f32 %v595, %v613
  %v634 = vmul.f32 %v596, %v614
  %v635 = vmul.f32 %v597, %v613
  %v636 = vmul.f32 %v598, %v614
  %v637 = vmul.f32 %v599, %v613
  %v638 = vmul.f32 %v600, %v614
  %v639 = vmul.f32 %v601, %v613
  %v640 = vmul.f32 %v602, %v614
  %v641 = vmul.f32 %v603, %v613
  %v642 = vmul.f32 %v604, %v614
  %v643 = vmul.f32 %v605, %v613
  %v644 = vmul.f32 %v606, %v614
  %v645 = vmul.f32 %v607, %v613
  %v646 = vmul.f32 %v608, %v614
  %v647 = vmul.f32 %v609, %v613
  %v648 = vmul.f32 %v610, %v614
  %v649 = vld [vmem:[%s4] sm:$0x3]
  %v651 = vperm.slane %v649, 0
  %v652 = vperm.slane %v649, 1
  %v655 = vadd.f32 %v617, %v651
  %v656 = vadd.f32 %v618, %v652
  %v657 = vadd.f32 %v619, %v651
  %v658 = vadd.f32 %v620, %v652
  %v659 = vadd.f32 %v621, %v651
  %v660 = vadd.f32 %v622, %v652
  %v661 = vadd.f32 %v623, %v651
  %v662 = vadd.f32 %v624, %v652
  %v663 = vadd.f32 %v625, %v651
  %v664 = vadd.f32 %v626, %v652
  %v665 = vadd.f32 %v627, %v651
  %v666 = vadd.f32 %v628, %v652
  %v667 = vadd.f32 %v629, %v651
  %v668 = vadd.f32 %v630, %v652
  %v669 = vadd.f32 %v631, %v651
  %v670 = vadd.f32 %v632, %v652
  %v671 = vadd.f32 %v633, %v651
  %v672 = vadd.f32 %v634, %v652
  %v673 = vadd.f32 %v635, %v651
  %v674 = vadd.f32 %v636, %v652
  %v675 = vadd.f32 %v637, %v651
  %v676 = vadd.f32 %v638, %v652
  %v677 = vadd.f32 %v639, %v651
  %v678 = vadd.f32 %v640, %v652
  %v679 = vadd.f32 %v641, %v651
  %v680 = vadd.f32 %v642, %v652
  %v681 = vadd.f32 %v643, %v651
  %v682 = vadd.f32 %v644, %v652
  %v683 = vadd.f32 %v645, %v651
  %v684 = vadd.f32 %v646, %v652
  %v685 = vadd.f32 %v647, %v651
  %v686 = vadd.f32 %v648, %v652
  %687 = vst [vmem:[%s5] sm:$0xff] %v655
  %688 = vst [vmem:[%s5 + $0x8] sm:$0xff] %v656
  %689 = vst [vmem:[%s5 + $0x10] sm:$0xff] %v657
  %690 = vst [vmem:[%s5 + $0x18] sm:$0xff] %v658
  %691 = vst [vmem:[%s5 + $0x20] sm:$0xff] %v659
  %692 = vst [vmem:[%s5 + $0x28] sm:$0xff] %v660
  %693 = vst [vmem:[%s5 + $0x30] sm:$0xff] %v661
  %694 = vst [vmem:[%s5 + $0x38] sm:$0xff] %v662
  %695 = vst [vmem:[%s5 + $0x40] sm:$0xff] %v663
  %696 = vst [vmem:[%s5 + $0x48] sm:$0xff] %v664
  %697 = vst [vmem:[%s5 + $0x50] sm:$0xff] %v665
  %698 = vst [vmem:[%s5 + $0x58] sm:$0xff] %v666
  %699 = vst [vmem:[%s5 + $0x60] sm:$0xff] %v667
  %700 = vst [vmem:[%s5 + $0x68] sm:$0xff] %v668
  %701 = vst [vmem:[%s5 + $0x70] sm:$0xff] %v669
  %702 = vst [vmem:[%s5 + $0x78] sm:$0xff] %v670
  %703 = vst [vmem:[%s5 + $0x80] sm:$0xff] %v671
  %704 = vst [vmem:[%s5 + $0x88] sm:$0xff] %v672
  %705 = vst [vmem:[%s5 + $0x90] sm:$0xff] %v673
  %706 = vst [vmem:[%s5 + $0x98] sm:$0xff] %v674
  %707 = vst [vmem:[%s5 + $0xa0] sm:$0xff] %v675
  %708 = vst [vmem:[%s5 + $0xa8] sm:$0xff] %v676
  %709 = vst [vmem:[%s5 + $0xb0] sm:$0xff] %v677
  %710 = vst [vmem:[%s5 + $0xb8] sm:$0xff] %v678
  %711 = vst [vmem:[%s5 + $0xc0] sm:$0xff] %v679
  %712 = vst [vmem:[%s5 + $0xc8] sm:$0xff] %v680
  %713 = vst [vmem:[%s5 + $0xd0] sm:$0xff] %v681
  %714 = vst [vmem:[%s5 + $0xd8] sm:$0xff] %v682
  %715 = vst [vmem:[%s5 + $0xe0] sm:$0xff] %v683
  %716 = vst [vmem:[%s5 + $0xe8] sm:$0xff] %v684
  %717 = vst [vmem:[%s5 + $0xf0] sm:$0xff] %v685
  %718 = vst [vmem:[%s5 + $0xf8] sm:$0xff] %v686
  // Predicated region
  $region22: #{patch_embed_forward.1} parent=0 // pred_check
    _
  $region23: #{patch_embed_forward.1} parent=0 // pred_check_branch
    %720 = sbr.rel (0) target = $region25
  $region24: #{patch_embed_forward.1} parent=0 // pred_region
    _
  $region25: #{patch_embed_forward.1} parent=0 // pred_fallthru
    _
  // Predicated region
  $region26: #{patch_embed_forward.1} parent=0 // pred_check
    _
  $region27: #{patch_embed_forward.1} parent=0 // pred_check_branch
    %722 = sbr.rel (0) target = $region29
  $region28: #{patch_embed_forward.1} parent=0 // pred_region
    _
  $region29: #{patch_embed_forward.1} parent=0 // pred_fallthru
    _

</llo_original>
